<compile_context>
chip_gen: v7x
topology: tpu7x:2x2x1
jax: 0.10.0
libtpu: 0.0.40
codegen_flags: <defaults>
</compile_context>

<pallas_src>
import jax
import jax.numpy as jnp
from jax.experimental import pallas as pl
from jax.experimental.pallas import tpu as pltpu


_MAX_BATCH_UNROLL = 8          # static unroll cap for batch-folded blocks
_TILE_BUDGET_BYTES = 32 << 20  # double-buffered in+out tile footprint budget
                               # (fits v7x's 64 MiB/TC with headroom; fine on v5e/v6e)
_TARGET_STEP_BYTES = 8 << 20   # aim for >= ~8 MiB moved per grid step


# ---------------------------------------------------------------------------
# Kernel: channels on sublanes, spatial on lanes, optional batch fold (nb)
# ---------------------------------------------------------------------------
def _make_pointwise_conv_kernel(nb):
    def kernel(x_ref, wt_ref, b_ref, o_ref):
        # x_ref : (nb, C_in,  L)   lane-dense spatial tile(s)
        # wt_ref: (C_out, C_in)    VMEM-resident across the whole grid
        # b_ref : (C_out, 1)
        # o_ref : (nb, C_out, L)   lane-dense output tile(s)
        wt = wt_ref[...]
        b32 = b_ref[...].astype(jnp.float32)
        for i in range(nb):  # static unroll, nb <= _MAX_BATCH_UNROLL
            acc = jnp.dot(wt, x_ref[i], preferred_element_type=jnp.float32)
            o_ref[i] = (acc + b32).astype(o_ref.dtype)
    return kernel


def _choose_blocks(N, C_in, C_out, HW, elem_in, elem_out):
    """Pick (batch fold nb, lane block) from an explicit VMEM tile budget."""
    # Double-buffered input + output bytes per lane column.
    lane_bytes = 2 * (C_in * elem_in + C_out * elem_out)
    budget_lanes = max(128, (_TILE_BUDGET_BYTES // lane_bytes) // 128 * 128)

    if HW <= budget_lanes:
        block_l = HW
        per_image_bytes = (C_in * elem_in + C_out * elem_out) * HW
        nb = min(N,
                 max(1, (_TILE_BUDGET_BYTES // lane_bytes) // HW),
                 max(1, _TARGET_STEP_BYTES // max(per_image_bytes, 1)),
                 _MAX_BATCH_UNROLL)
        # Megacore: keep >=2 parallel grid steps when each step would still
        # move >= ~1 MiB (otherwise fold fully -- pure per-step overhead).
        if nb >= N and N >= 2 and per_image_bytes * ((N + 1) // 2) >= (1 << 20):
            nb = (N + 1) // 2
        # Prefer nb dividing N so there is no padded tail block.
        while N % nb != 0:
            nb -= 1
        return nb, block_l

    # Large images: tile the lane axis; prefer a block that divides HW so the
    # last writeback stays fully lane-dense (no masked vst tail).
    block_l = budget_lanes
    for cand in range(budget_lanes, 127, -128):
        if HW % cand == 0:
            block_l = cand
            break
    return 1, block_l


def conv_transpose_1x1_pallas(x_nchw, weight, bias, *, out_dtype=None):
    """1x1 / stride-1 ConvTranspose2d as a lane-major Pallas channel matmul.

    x_nchw : (N, C_in, H, W)
    weight : (C_in, C_out)   (ConvTranspose2d weight is (in_c, out_c, 1, 1))
    bias   : (C_out,)
    returns: (N, C_out, H, W) in out_dtype (default: x dtype), f32 accumulation.
    """
    N, C_in, H, W = x_nchw.shape
    C_out = weight.shape[1]
    HW = H * W
    out_dtype = x_nchw.dtype if out_dtype is None else out_dtype

    # Free reshape: spatial flattened onto the lane axis, channels on sublanes.
    x_lanes = x_nchw.reshape(N, C_in, HW)
    w_t = jnp.transpose(weight)          # (C_out, C_in)  -- tiny, one-time
    bias2d = bias.reshape(C_out, 1)

    elem_in = jnp.dtype(x_nchw.dtype).itemsize
    elem_out = jnp.dtype(out_dtype).itemsize
    nb, block_l = _choose_blocks(N, C_in, C_out, HW, elem_in, elem_out)

    grid = (pl.cdiv(N, nb), pl.cdiv(HW, block_l))

    # VMEM budget: double-buffered in/out tiles + (double-buffered) params,
    # with 2x headroom for Mosaic scratch; capped well below v7x's 64 MiB/TC.
    lane_bytes = 2 * (C_in * elem_in + C_out * elem_out)
    tile_bytes = nb * block_l * lane_bytes
    param_bytes = 2 * (C_out * C_in + C_out) * 4
    vmem_limit = int(min(max(2 * (tile_bytes + param_bytes), 8 << 20), 48 << 20))

    out = pl.pallas_call(
        _make_pointwise_conv_kernel(nb),
        out_shape=jax.ShapeDtypeStruct((N, C_out, HW), out_dtype),
        grid_spec=pltpu.PrefetchScalarGridSpec(
            num_scalar_prefetch=0,
            grid=grid,
            in_specs=[
                pl.BlockSpec((nb, C_in, block_l), lambda n, j: (n, 0, j)),
                pl.BlockSpec((C_out, C_in), lambda n, j: (0, 0)),
                pl.BlockSpec((C_out, 1), lambda n, j: (0, 0)),
            ],
            out_specs=pl.BlockSpec((nb, C_out, block_l), lambda n, j: (n, 0, j)),
        ),
        compiler_params=pltpu.CompilerParams(
            dimension_semantics=("parallel", "parallel"),
            vmem_limit_bytes=vmem_limit),
    )(x_lanes, w_t, bias2d)

    return out.reshape(N, C_out, H, W)   # free reshape back to NCHW


# ---------------------------------------------------------------------------
# Nearest-neighbor interpolate (PyTorch F.interpolate default mode='nearest')
# Separable: 1-D takes, or reshape-free repeat for integer scale factors.
# ---------------------------------------------------------------------------
def nearest_interpolate_nchw(y, out_hw):
    out_h, out_w = out_hw
    _, _, H, W = y.shape
    if (out_h, out_w) == (H, W):
        return y
    if out_h % H == 0 and out_w % W == 0:
        # Integer scale: floor(i*H/out_h) == i // s  =>  plain repeat.
        y = jnp.repeat(y, out_h // H, axis=2)
        y = jnp.repeat(y, out_w // W, axis=3)
        return y
    # PyTorch 'nearest': src = floor(dst * in_size / out_size)
    idx_h = (jnp.arange(out_h) * H) // out_h
    idx_w = (jnp.arange(out_w) * W) // out_w
    y = jnp.take(y, idx_h, axis=2)
    y = jnp.take(y, idx_w, axis=3)
    return y


def output_transform_forward(x_nchw, weight, bias, dim, out_dtype=None):
    out_h, out_w = (dim, dim) if isinstance(dim, int) else tuple(dim)
    _, _, H, W = x_nchw.shape
    # 1x1 pointwise conv commutes with the nearest gather: when downsampling,
    # gather first so the matmul sees fewer pixels and HBM traffic shrinks.
    if out_h * out_w < H * W:
        x_small = nearest_interpolate_nchw(x_nchw, (out_h, out_w))
        return conv_transpose_1x1_pallas(x_small, weight, bias, out_dtype=out_dtype)
    y = conv_transpose_1x1_pallas(x_nchw, weight, bias, out_dtype=out_dtype)
    return nearest_interpolate_nchw(y, (out_h, out_w))


if __name__ == "__main__":
    # Module hyper-parameters (small, consistent with the forward pass)
    in_c, out_c = 4, 8
    dim = 24                       # output spatial size for F.interpolate
    N, H, W = 2, 16, 16

    key = jax.random.PRNGKey(0)
    kx, kw, kb = jax.random.split(key, 3)

    x = jax.random.normal(kx, (N, in_c, H, W), dtype=jnp.float32)
    # ConvTranspose2d weight shape is (in_c, out_c, 1, 1); kept as (in_c, out_c)
    weight = jax.random.normal(kw, (in_c, out_c), dtype=jnp.float32) * 0.1
    bias = jax.random.normal(kb, (out_c,), dtype=jnp.float32) * 0.1

    out = jax.block_until_ready(output_transform_forward(x, weight, bias, dim))
    assert out.shape == (N, out_c, dim, dim), out.shape

    # Pure-JAX reference check of the same semantics
    y_ref = jnp.einsum("nchw,co->nohw", x, weight) + bias[None, :, None, None]
    ref = nearest_interpolate_nchw(y_ref, (dim, dim))
    assert jnp.allclose(out, ref, atol=1e-5, rtol=1e-5), "upsample mismatch"

    # Downsample path (interp-before-conv commutation)
    out_dn = jax.block_until_ready(output_transform_forward(x, weight, bias, 8))
    ref_dn = nearest_interpolate_nchw(y_ref, (8, 8))
    assert out_dn.shape == (N, out_c, 8, 8)
    assert jnp.allclose(out_dn, ref_dn, atol=1e-5, rtol=1e-5), "downsample mismatch"

    # Integer-scale (repeat) upsample path
    out_2x = jax.block_until_ready(output_transform_forward(x, weight, bias, 32))
    ref_2x = jnp.repeat(jnp.repeat(y_ref, 2, axis=2), 2, axis=3)
    assert jnp.allclose(out_2x, ref_2x, atol=1e-5, rtol=1e-5), "2x mismatch"

    # bf16 output path (f32 accumulation, half the writeback traffic)
    out_bf16 = jax.block_until_ready(
        output_transform_forward(x, weight, bias, dim, out_dtype=jnp.bfloat16))
    assert out_bf16.dtype == jnp.bfloat16
    assert jnp.allclose(out_bf16.astype(jnp.float32), ref, atol=5e-2, rtol=5e-2), \
        "bf16 mismatch"

    print("KERNEL_OK")
</pallas_src>

<mosaic_0001>
module attributes {stable_mosaic.version = 11 : i64} {
  func.func @kernel(%arg0: i32, %arg1: i32, %arg2: memref<2x4x256xf32, #tpu.memory_space<vmem>>, %arg3: memref<8x4xf32, #tpu.memory_space<vmem>>, %arg4: memref<8x1xf32, #tpu.memory_space<vmem>>, %arg5: memref<2x8x256xf32, #tpu.memory_space<vmem>>) attributes {dimension_semantics = [#tpu.dimension_semantics<parallel>, #tpu.dimension_semantics<parallel>], iteration_bounds = array<i64: 1, 1>, scalar_prefetch = 0 : i64, scratch_operands = 0 : i64, tpu.core_type = #tpu.core_type<tc>, window_params = [{transform_indices = @transform_0, window_bounds = array<i64: 2, 4, 256>}, {pipeline_mode = #tpu.pipeline_mode<synchronous>, transform_indices = @transform_1, window_bounds = array<i64: 8, 4>}, {pipeline_mode = #tpu.pipeline_mode<synchronous>, transform_indices = @transform_2, window_bounds = array<i64: 8, 1>}, {transform_indices = @transform_3, window_bounds = array<i64: 2, 8, 256>}]} {
    %c0 = arith.constant 0 : index
    %c0_0 = arith.constant 0 : index
    %0 = vector.load %arg3[%c0, %c0_0] : memref<8x4xf32, #tpu.memory_space<vmem>>, vector<8x4xf32>
    %c0_1 = arith.constant 0 : index
    %c0_2 = arith.constant 0 : index
    %1 = vector.load %arg4[%c0_1, %c0_2] : memref<8x1xf32, #tpu.memory_space<vmem>>, vector<8x1xf32>
    %c0_3 = arith.constant 0 : index
    %c0_4 = arith.constant 0 : index
    %c0_5 = arith.constant 0 : index
    %2 = vector.load %arg2[%c0_3, %c0_4, %c0_5] : memref<2x4x256xf32, #tpu.memory_space<vmem>>, vector<1x4x256xf32>
    %3 = vector.shape_cast %2 : vector<1x4x256xf32> to vector<4x256xf32>
    %cst = arith.constant dense<0.000000e+00> : vector<8x256xf32>
    %4 = tpu.matmul %0, %3, %cst {dimension_numbers = #tpu.dot_dimension_numbers<[1], [0], [0], [1], [0, 0, 1, 1], [], []>} : vector<8x4xf32>, vector<4x256xf32>, vector<8x256xf32> -> vector<8x256xf32>
    %5 = vector.broadcast %1 : vector<8x1xf32> to vector<8x256xf32>
    %6 = arith.addf %4, %5 : vector<8x256xf32>
    %c0_6 = arith.constant 0 : index
    %c0_7 = arith.constant 0 : index
    %c0_8 = arith.constant 0 : index
    %7 = vector.load %arg5[%c0_6, %c0_7, %c0_8] : memref<2x8x256xf32, #tpu.memory_space<vmem>>, vector<1x8x256xf32>
    %8 = vector.shape_cast %7 : vector<1x8x256xf32> to vector<8x256xf32>
    %9 = vector.shape_cast %6 : vector<8x256xf32> to vector<1x8x256xf32>
    tpu.vector_store %arg5[%c0_6, %c0_7, %c0_8], %9 {strides = array<i32>} : memref<2x8x256xf32, #tpu.memory_space<vmem>>, vector<1x8x256xf32>,
    %c1 = arith.constant 1 : index
    %c0_9 = arith.constant 0 : index
    %c0_10 = arith.constant 0 : index
    %10 = vector.load %arg2[%c1, %c0_9, %c0_10] : memref<2x4x256xf32, #tpu.memory_space<vmem>>, vector<1x4x256xf32>
    %11 = vector.shape_cast %10 : vector<1x4x256xf32> to vector<4x256xf32>
    %cst_11 = arith.constant dense<0.000000e+00> : vector<8x256xf32>
    %12 = tpu.matmul %0, %11, %cst_11 {dimension_numbers = #tpu.dot_dimension_numbers<[1], [0], [0], [1], [0, 0, 1, 1], [], []>} : vector<8x4xf32>, vector<4x256xf32>, vector<8x256xf32> -> vector<8x256xf32>
    %13 = vector.broadcast %1 : vector<8x1xf32> to vector<8x256xf32>
    %14 = arith.addf %12, %13 : vector<8x256xf32>
    %c1_12 = arith.constant 1 : index
    %c0_13 = arith.constant 0 : index
    %c0_14 = arith.constant 0 : index
    %15 = vector.load %arg5[%c1_12, %c0_13, %c0_14] : memref<2x8x256xf32, #tpu.memory_space<vmem>>, vector<1x8x256xf32>
    %16 = vector.shape_cast %15 : vector<1x8x256xf32> to vector<8x256xf32>
    %17 = vector.shape_cast %14 : vector<8x256xf32> to vector<1x8x256xf32>
    tpu.vector_store %arg5[%c1_12, %c0_13, %c0_14], %17 {strides = array<i32>} : memref<2x8x256xf32, #tpu.memory_space<vmem>>, vector<1x8x256xf32>,
    return
  }
  func.func @transform_0(%arg0: i32, %arg1: i32) -> (i32, i32, i32) {
    %c0_i32 = arith.constant 0 : i32
    %c0_i32_0 = arith.constant 0 : i32
    return %arg0, %c0_i32, %arg1 : i32, i32, i32
  }
  func.func @transform_1(%arg0: i32, %arg1: i32) -> (i32, i32) {
    %c0_i32 = arith.constant 0 : i32
    %c0_i32_0 = arith.constant 0 : i32
    %c0_i32_1 = arith.constant 0 : i32
    return %c0_i32, %c0_i32_0 : i32, i32
  }
  func.func @transform_2(%arg0: i32, %arg1: i32) -> (i32, i32) {
    %c0_i32 = arith.constant 0 : i32
    %c0_i32_0 = arith.constant 0 : i32
    %c0_i32_1 = arith.constant 0 : i32
    return %c0_i32, %c0_i32_0 : i32, i32
  }
  func.func @transform_3(%arg0: i32, %arg1: i32) -> (i32, i32, i32) {
    %c0_i32 = arith.constant 0 : i32
    %c0_i32_0 = arith.constant 0 : i32
    return %arg0, %c0_i32, %arg1 : i32, i32, i32
  }
}

</mosaic_0001>

<llo_original>
// kernel: tpu_custom_call.1
$region0: #{tpu_custom_call.1}
  #allocation0 [shape = 'u32[]', space=smem, size = 0x4, offset = 0x4, fixed_abs, tag = 'smem constant byte address 0x4 - core index']
  #allocation1 [shape = 'u32[144,128]{1,0:T(1,128)}', space=vmem, size = 0x12000, scoped, tag = 'internal scratch']
  %s0 = inlined_call_operand.vmem [shape: f32[2,4,256], index: 0, kind: input, shape index: {}]
  %s1 = inlined_call_operand.vmem [shape: f32[8,4], index: 1, kind: input, shape index: {}]
  %s2 = inlined_call_operand.vmem [shape: f32[8,1], index: 2, kind: input, shape index: {}]
  %s3 = inlined_call_operand.hbm [shape: f32[2,8,256], index: 3, kind: output, shape index: {}]
  %s4 = sld [smem:[#allocation0]]
  $region22: #{tpu_custom_call.1} parent=0
    _
  %s6 = ssub.s32 1, %s4
  %s7 = scalar_select 0, %s6, %s4
  $region1: #{tpu_custom_call.1} parent=0
    #allocation2 [shape = 'u8[16384]{0}', space=vmem, size = 0x4000, scoped, tag = 'output window, operand 0, single buffered']
    #allocation3 [shape = 's32[1]{0}', space=sflag, size = 0x4, scoped, tag = 'scoped memory for tpu_custom_call.1']
    %8 = vsyncpa [#allocation3], 0
    // Predicated region
    $region2: #{tpu_custom_call.1} parent=1 // pred_check
      _
    $region3: #{tpu_custom_call.1} parent=1 // pred_check_branch
      %10 = sbr.rel (0) target = $region5
    $region4: #{tpu_custom_call.1} parent=1 // pred_region
      _
    $region5: #{tpu_custom_call.1} parent=1 // pred_fallthru
      _
    // Predicated region
    $region6: #{tpu_custom_call.1} parent=1 // pred_check
      _
    $region7: #{tpu_custom_call.1} parent=1 // pred_check_branch
      %12 = sbr.rel (0) target = $region9
    $region8: #{tpu_custom_call.1} parent=1 // pred_region
      _
    $region9: #{tpu_custom_call.1} parent=1 // pred_fallthru
      _
    // Predicated region
    $region10: #{tpu_custom_call.1} parent=1 // pred_check
      _
    $region11: #{tpu_custom_call.1} parent=1 // pred_check_branch
      %14 = sbr.rel (0) target = $region13
    $region12: #{tpu_custom_call.1} parent=1 // pred_region
      _
    $region13: #{tpu_custom_call.1} parent=1 // pred_fallthru
      _
    %v15 = vld [vmem:[%s1] sm:$0xff]
    %v16 = vld [vmem:[%s2] sm:$0xff]
    %v17 = vld [vmem:[%s0] sm:$0xff]
    %19 = vset.pattern.permute.xlu0 0
    %20 = vperm.xlu0 %19, %v16
    %v21 = vpop.permute.xlu0 %20
    %v24 = vcombine.high %v17, %v17
    %vm25 = vcmask 31744
    %v27 = vsel %vm25, %v15, 0
    %vm29 = vcmask 1043456
    %v30 = vsel %vm29, %v17, 0
    %v32 = vsel %vm29, %v24, 0
    %34 = vmatprep.subr.mxu0 %v32
    %35 = vmatpush1.msra.mxu0 %v30
    %36 = vmatprep.subr.mxu0 0.0
    %37 = vmatpush1.msra.mxu0 0.0
    %38 = vmatprep.subr.mxu0 0.0
    %39 = vmatpush1.msra.mxu0 0.0
    %40 = vmatprep.subr.mxu0 0.0
    %41 = vmatpush1.msra.mxu0 0.0
    %42 = vmatprep.subr.mxu0 0.0
    %43 = vmatpush1.msra.mxu0 0.0
    %44 = vmatprep.subr.mxu0 0.0
    %45 = vmatpush1.msra.mxu0 0.0
    %46 = vmatprep.subr.mxu0 0.0
    %47 = vmatpush1.msra.mxu0 0.0
    %48 = vmatprep.subr.mxu0 0.0
    %49 = vmatpush1.msra.mxu0 0.0
    %50 = vmatprep.subr.mxu0 0.0
    %51 = vmatpush1.msra.mxu0 0.0
    %52 = vmatprep.subr.mxu0 0.0
    %53 = vmatpush1.msra.mxu0 0.0
    %54 = vmatprep.subr.mxu0 0.0
    %55 = vmatpush1.msra.mxu0 0.0
    %56 = vmatprep.subr.mxu0 0.0
    %57 = vmatpush1.msra.mxu0 0.0
    %58 = vmatprep.subr.mxu0 0.0
    %59 = vmatpush1.msra.mxu0 0.0
    %60 = vmatprep.subr.mxu0 0.0
    %61 = vmatpush1.msra.mxu0 0.0
    %62 = vmatprep.subr.mxu0 0.0
    %63 = vmatpush1.msra.mxu0 0.0
    %64 = vmatprep.subr.mxu0 0.0
    %65 = vmatpush1.msra.mxu0 0.0
    %66 = vmatprep.subr.mxu0 0.0
    %67 = vmatpush1.msra.mxu0 0.0
    %68 = vmatprep.subr.mxu0 0.0
    %69 = vmatpush1.msra.mxu0 0.0
    %70 = vmatprep.subr.mxu0 0.0
    %71 = vmatpush1.msra.mxu0 0.0
    %72 = vmatprep.subr.mxu0 0.0
    %73 = vmatpush1.msra.mxu0 0.0
    %74 = vmatprep.subr.mxu0 0.0
    %75 = vmatpush1.msra.mxu0 0.0
    %76 = vmatprep.subr.mxu0 0.0
    %77 = vmatpush1.msra.mxu0 0.0
    %78 = vmatprep.subr.mxu0 0.0
    %79 = vmatpush1.msra.mxu0 0.0
    %80 = vmatprep.subr.mxu0 0.0
    %81 = vmatpush1.msra.mxu0 0.0
    %82 = vmatprep.subr.mxu0 0.0
    %83 = vmatpush1.msra.mxu0 0.0
    %84 = vmatprep.subr.mxu0 0.0
    %85 = vmatpush1.msra.mxu0 0.0
    %86 = vmatprep.subr.mxu0 0.0
    %87 = vmatpush1.msra.mxu0 0.0
    %88 = vmatprep.subr.mxu0 0.0
    %89 = vmatpush1.msra.mxu0 0.0
    %90 = vmatprep.subr.mxu0 0.0
    %91 = vmatpush1.msra.mxu0 0.0
    %92 = vmatprep.subr.mxu0 0.0
    %93 = vmatpush1.msra.mxu0 0.0
    %94 = vmatprep.subr.mxu0 0.0
    %95 = vmatpush1.msra.mxu0 0.0
    %96 = vmatprep.subr.mxu0 0.0
    %97 = vmatpush1.msra.mxu0 0.0
    %98 = vmatprep.mubr.f32.mxu0 0.0
    %99 = vmatmul.mubr.f32.gmra.mrb[0].mxu0 %v27
    %v100 = vpop.f32.mrb[0].mxu0
    %v101 = vadd.f32 %v21, %v100
    %v102 = vpop.f32.mrb[0].mxu0
    %v103 = vadd.f32 %v21, %v102
    %104 = vdwg.mxu0
    %105 = vst [vmem:[#allocation2] sm:$0xff] %v101
    %106 = vst [vmem:[#allocation2 + $0x8] sm:$0xff] %v103
    %s107 = scalar_lea.vmem %s0, 8
    %v108 = vld [vmem:[%s107] sm:$0xff]
    %v110 = vcombine.high %v108, %v108
    %v111 = vsel %vm29, %v108, 0
    %v113 = vsel %vm29, %v110, 0
    %115 = vmatprep.subr.mxu0 %v113
    %116 = vmatpush1.msra.mxu0 %v111
    %117 = vmatprep.subr.mxu0 0.0
    %118 = vmatpush1.msra.mxu0 0.0
    %119 = vmatprep.subr.mxu0 0.0
    %120 = vmatpush1.msra.mxu0 0.0
    %121 = vmatprep.subr.mxu0 0.0
    %122 = vmatpush1.msra.mxu0 0.0
    %123 = vmatprep.subr.mxu0 0.0
    %124 = vmatpush1.msra.mxu0 0.0
    %125 = vmatprep.subr.mxu0 0.0
    %126 = vmatpush1.msra.mxu0 0.0
    %127 = vmatprep.subr.mxu0 0.0
    %128 = vmatpush1.msra.mxu0 0.0
    %129 = vmatprep.subr.mxu0 0.0
    %130 = vmatpush1.msra.mxu0 0.0
    %131 = vmatprep.subr.mxu0 0.0
    %132 = vmatpush1.msra.mxu0 0.0
    %133 = vmatprep.subr.mxu0 0.0
    %134 = vmatpush1.msra.mxu0 0.0
    %135 = vmatprep.subr.mxu0 0.0
    %136 = vmatpush1.msra.mxu0 0.0
    %137 = vmatprep.subr.mxu0 0.0
    %138 = vmatpush1.msra.mxu0 0.0
    %139 = vmatprep.subr.mxu0 0.0
    %140 = vmatpush1.msra.mxu0 0.0
    %141 = vmatprep.subr.mxu0 0.0
    %142 = vmatpush1.msra.mxu0 0.0
    %143 = vmatprep.subr.mxu0 0.0
    %144 = vmatpush1.msra.mxu0 0.0
    %145 = vmatprep.subr.mxu0 0.0
    %146 = vmatpush1.msra.mxu0 0.0
    %147 = vmatprep.subr.mxu0 0.0
    %148 = vmatpush1.msra.mxu0 0.0
    %149 = vmatprep.subr.mxu0 0.0
    %150 = vmatpush1.msra.mxu0 0.0
    %151 = vmatprep.subr.mxu0 0.0
    %152 = vmatpush1.msra.mxu0 0.0
    %153 = vmatprep.subr.mxu0 0.0
    %154 = vmatpush1.msra.mxu0 0.0
    %155 = vmatprep.subr.mxu0 0.0
    %156 = vmatpush1.msra.mxu0 0.0
    %157 = vmatprep.subr.mxu0 0.0
    %158 = vmatpush1.msra.mxu0 0.0
    %159 = vmatprep.subr.mxu0 0.0
    %160 = vmatpush1.msra.mxu0 0.0
    %161 = vmatprep.subr.mxu0 0.0
    %162 = vmatpush1.msra.mxu0 0.0
    %163 = vmatprep.subr.mxu0 0.0
    %164 = vmatpush1.msra.mxu0 0.0
    %165 = vmatprep.subr.mxu0 0.0
    %166 = vmatpush1.msra.mxu0 0.0
    %167 = vmatprep.subr.mxu0 0.0
    %168 = vmatpush1.msra.mxu0 0.0
    %169 = vmatprep.subr.mxu0 0.0
    %170 = vmatpush1.msra.mxu0 0.0
    %171 = vmatprep.subr.mxu0 0.0
    %172 = vmatpush1.msra.mxu0 0.0
    %173 = vmatprep.subr.mxu0 0.0
    %174 = vmatpush1.msra.mxu0 0.0
    %175 = vmatprep.subr.mxu0 0.0
    %176 = vmatpush1.msra.mxu0 0.0
    %177 = vmatprep.subr.mxu0 0.0
    %178 = vmatpush1.msra.mxu0 0.0
    %179 = vmatprep.mubr.f32.mxu0 0.0
    %180 = vmatmul.mubr.f32.gmra.mrb[0].mxu0 %v27
    %v181 = vpop.f32.mrb[0].mxu0
    %v182 = vadd.f32 %v21, %v181
    %v183 = vpop.f32.mrb[0].mxu0
    %v184 = vadd.f32 %v21, %v183
    %185 = vdwg.mxu0
    %s186 = scalar_lea.vmem [#allocation2], 16
    %187 = vst [vmem:[%s186] sm:$0xff] %v182
    %188 = vst [vmem:[%s186 + $0x8] sm:$0xff] %v184
    // Predicated region
    $region14: #{tpu_custom_call.1} parent=1 // pred_check
      _
    $region15: #{tpu_custom_call.1} parent=1 // pred_check_branch
      %190 = sbr.rel (0) target = $region17
    $region16: #{tpu_custom_call.1} parent=1 // pred_region
      %s192 = ssub.s32 512, 512
      %193 = vsyncadd [#allocation3], %s192
      %s194 = sshll.u32 [#allocation2], 4
      %s195 = int_to_ptr.vmem [resolvable:$true] %s194
      %200 = dma.vmem_to_hbm [thread:$0]  %s195, 512, %s3, [#allocation3], 256, 256, 16
    $region17: #{tpu_custom_call.1} parent=1 // pred_fallthru
      _
    // Predicated region
    $region18: #{tpu_custom_call.1} parent=1 // pred_check
      _
    $region19: #{tpu_custom_call.1} parent=1 // pred_check_branch
      %202 = sbr.rel (0) target = $region21
    $region20: #{tpu_custom_call.1} parent=1 // pred_region
      %203 = dma.done [#allocation3], 512
    $region21: #{tpu_custom_call.1} parent=1 // pred_fallthru
      _
    %204 = vsyncpa [#allocation3], 1

</llo_original>
